<compile_context>
chip_gen: v7x
topology: tpu7x:2x2x1
jax: 0.10.0
libtpu: 0.0.40
codegen_flags: <defaults>
</compile_context>

<pallas_src>
import functools

import jax
import jax.numpy as jnp
from jax import lax
from jax.experimental import pallas as pl
from jax.experimental.pallas import tpu as pltpu


def _f1_kernel(sl_ref, el_ref, pos_ref, out_ref,
               pred_acc, tgt_acc, match_acc, *, batch, cast_f32):
    pid = pl.program_id(0)
    nsteps = pl.num_programs(0)
    TB, L = sl_ref.shape

    @pl.when(pid == 0)
    def _init():
        pred_acc[...] = jnp.zeros_like(pred_acc)
        tgt_acc[...] = jnp.zeros_like(tgt_acc)
        match_acc[...] = jnp.zeros_like(match_acc)

    # First-occurrence argmax along the lane (sequence) axis.  The per-tile
    # int32 iota is generated on the fly (vregs/VMEM temporaries only).
    lane_iota = lax.broadcasted_iota(jnp.int32, (TB, L), 1)

    def argmax_first(x):
        m = jnp.max(x, axis=-1, keepdims=True)
        idx = jnp.where(x == m, lane_iota, L)
        return jnp.min(idx, axis=-1, keepdims=True)      # (TB, 1) int32

    sl = sl_ref[...]
    el = el_ref[...]
    if cast_f32:
        # v5e (no bf16 VPU) / unknown chip: per-tile cast inside VMEM — no
        # extra HBM traffic.
        sl = sl.astype(jnp.float32)
        el = el.astype(jnp.float32)
    sp_pred = argmax_first(sl)                            # (TB, 1) int32
    ep_pred = argmax_first(el)                            # (TB, 1) int32

    # Extract start/end columns from the (TB, 2) positions block via a masked
    # lane-reduce (avoids an offset-1 lane slice / relayout).
    pos = pos_ref[...]                                    # (TB, 2) int32
    col = lax.broadcasted_iota(jnp.int32, (TB, 2), 1)
    start = jnp.sum(jnp.where(col == 0, pos, 0), axis=-1, keepdims=True)
    end = jnp.sum(jnp.where(col == 1, pos, 0), axis=-1, keepdims=True)

    # Mask rows that are batch padding OR ragged-last-block undefined rows.
    row = pid * TB + lax.broadcasted_iota(jnp.int32, (TB, 1), 0)
    valid = row < batch

    # pred_len term counted only when sp < ep (strict), as in the torch loop.
    pred_terms = jnp.where(valid & (sp_pred < ep_pred), ep_pred - sp_pred, 0)
    target_terms = jnp.where(valid, end - start, 0)
    # |[sp, ep] ∩ [start, end]| over inclusive integer ranges (closed form of
    # the torch double loop).
    overlap = jnp.where(
        valid,
        jnp.maximum(jnp.minimum(ep_pred, end) - jnp.maximum(sp_pred, start) + 1, 0),
        0)

    pred_acc[...] += jnp.sum(pred_terms.astype(jnp.float32), axis=0, keepdims=True)
    tgt_acc[...] += jnp.sum(target_terms.astype(jnp.float32), axis=0, keepdims=True)
    match_acc[...] += jnp.sum(overlap.astype(jnp.float32), axis=0, keepdims=True)

    @pl.when(pid == nsteps - 1)
    def _epilogue():
        pred_len = pred_acc[...] + 1e-10                  # (1, 1)
        target_len = tgt_acc[...] + 1e-10
        match = match_acc[...]
        prec = match / pred_len + 1e-10
        recall = match / target_len + 1e-10
        f1 = 2.0 * prec * recall / (prec + recall)

        ones = jnp.ones((1, 128), jnp.float32)
        out_lane = lax.broadcasted_iota(jnp.int32, (1, 128), 1)
        out_ref[...] = jnp.where(out_lane == 0, prec * ones,
                                 jnp.where(out_lane == 1, recall * ones,
                                           f1 * ones))


def _device_kind():
    try:
        return jax.devices()[0].device_kind.lower()
    except Exception:
        return ""


def f1_score(start_logits, end_logits, start_pos, end_pos, *, tile_rows=None):
    """start_logits/end_logits: (B, L); start_pos/end_pos: (B,) integer."""
    B, L = start_logits.shape
    dtype = start_logits.dtype
    itemsize = jnp.dtype(dtype).itemsize

    kind = _device_kind()
    is_v7 = "v7" in kind
    has_bf16_vpu = ("v6" in kind) or is_v7
    # Cast sub-f32 logits to f32 per-tile only when the VPU lacks bf16 ALUs
    # (v5e / unknown); v6e & v7x keep the native packed dtype (fewer VPU
    # passes, half the intermediate VMEM).
    cast_f32 = (itemsize < 4) and not has_bf16_vpu

    # Sublane packing rows for the logits dtype: 8 (f32) / 16 (bf16) / 32 (i8).
    packing = 8 * max(1, 4 // itemsize)

    # Consolidate positions into one (B, 2) int32 input.
    pos = jnp.stack([start_pos.astype(jnp.int32),
                     end_pos.astype(jnp.int32)], axis=-1)

    # Degenerate tiny batch: pad up to one packed sublane tile (cheap, tiny).
    if B < packing:
        pad = packing - B
        start_logits = jnp.pad(start_logits, ((0, pad), (0, 0)))
        end_logits = jnp.pad(end_logits, ((0, pad), (0, 0)))
        pos = jnp.pad(pos, ((0, pad), (0, 0)))
        b_rows = packing
    else:
        b_rows = B   # no full-array pad: ragged last block is masked in-kernel

    if tile_rows is None:
        # Per-row VMEM bytes: 2 inputs x 2 pipeline buffers of logits plus
        # ~16 B/elem headroom for in-kernel intermediates (int32 lane iota,
        # int32 `where` result, optional f32 casts at reduce boundaries).
        per_row = (2 * 2 * itemsize + 16) * L
        budget = (20 << 20) if is_v7 else (32 << 20)   # v7x: 64 MiB VMEM/TC
        tb = budget // per_row
        tb = int(max(packing, min(tb, 4096)))
    else:
        tb = int(max(packing, tile_rows))
    tb = (tb // packing) * packing
    # Keep the block no taller than the (packed) array so the last block only
    # overhangs, never exceeds, the array's sublane extent.
    tb = min(tb, (b_rows // packing) * packing)
    nsteps = pl.cdiv(b_rows, tb)

    tile_logits = 2 * 2 * tb * L * itemsize              # double-buffered inputs
    tile_scratch = 4 * tb * L * 4                        # intermediate headroom
    cap = (48 << 20) if is_v7 else (96 << 20)
    vmem_limit = int(min(max(tile_logits + tile_scratch + (1 << 20), 16 << 20), cap))

    cost = pl.CostEstimate(
        flops=10 * b_rows * L,
        transcendentals=0,
        bytes_accessed=2 * B * L * itemsize + B * 2 * 4 + 128 * 4,
    )

    out = pl.pallas_call(
        functools.partial(_f1_kernel, batch=B, cast_f32=cast_f32),
        out_shape=jax.ShapeDtypeStruct((1, 128), jnp.float32),
        grid_spec=pltpu.PrefetchScalarGridSpec(
            num_scalar_prefetch=0,
            grid=(nsteps,),
            in_specs=[
                pl.BlockSpec((tb, L), lambda i: (i, 0)),
                pl.BlockSpec((tb, L), lambda i: (i, 0)),
                pl.BlockSpec((tb, 2), lambda i: (i, 0)),
            ],
            out_specs=pl.BlockSpec((1, 128), lambda i: (0, 0)),
            scratch_shapes=[
                pltpu.VMEM((1, 1), jnp.float32),   # pred_len accumulator
                pltpu.VMEM((1, 1), jnp.float32),   # target_len accumulator
                pltpu.VMEM((1, 1), jnp.float32),   # match accumulator
            ],
        ),
        compiler_params=pltpu.CompilerParams(
            dimension_semantics=("arbitrary",),
            vmem_limit_bytes=vmem_limit,
        ),
        cost_estimate=cost,
    )(start_logits, end_logits, pos)

    return out[0, 0], out[0, 1], out[0, 2]


def _reference(start_logits, end_logits, start_pos, end_pos):
    # Pure-numpy replica of the torch loop (fresh-module state).
    import numpy as np
    sl = np.asarray(jnp.asarray(start_logits, jnp.float32))
    el = np.asarray(jnp.asarray(end_logits, jnp.float32))
    sp_pred = sl.argmax(-1); ep_pred = el.argmax(-1)
    pred_len, target_len, match = 1e-10, 1e-10, 0.0
    for sp, ep, st, en in zip(sp_pred, ep_pred,
                              np.asarray(start_pos), np.asarray(end_pos)):
        sp, ep, st, en = int(sp), int(ep), int(st), int(en)
        if sp < ep:
            pred_len += ep - sp
        target_len += en - st
        for idx in range(sp, ep + 1):
            if idx in range(st, en + 1):
                match += 1
    prec = match / pred_len + 1e-10
    recall = match / target_len + 1e-10
    f1 = 2 * prec * recall / (prec + recall)
    return prec, recall, f1


def _check(got, ref):
    for g, r in zip(got, ref):
        assert abs(g - r) <= 1e-5 + 1e-5 * abs(r), (got, ref)


if __name__ == "__main__":
    key = jax.random.PRNGKey(0)

    # Case 1: small, single-tile grid (f32).
    B, L = 8, 128
    k1, k2, k3, k4, key = jax.random.split(key, 5)
    start_logits = jax.random.normal(k1, (B, L), dtype=jnp.float32)
    end_logits = jax.random.normal(k2, (B, L), dtype=jnp.float32)
    start_pos = jax.random.randint(k3, (B,), 0, L - 20, dtype=jnp.int32)
    end_pos = start_pos + jax.random.randint(k4, (B,), 0, 20, dtype=jnp.int32)

    prec, recall, f1 = f1_score(start_logits, end_logits, start_pos, end_pos)
    jax.block_until_ready((prec, recall, f1))
    _check((float(prec), float(recall), float(f1)),
           _reference(start_logits, end_logits, start_pos, end_pos))

    # Case 2: multi-step grid with a ragged (non-divisible) last block —
    # exercises the accumulator pipeline and the valid-row mask with NO
    # wrapper-side padding of the logits.
    B2, L2 = 10, 256
    k1, k2, k3, k4, key = jax.random.split(key, 5)
    sl2 = jax.random.normal(k1, (B2, L2), dtype=jnp.float32)
    el2 = jax.random.normal(k2, (B2, L2), dtype=jnp.float32)
    sp2 = jax.random.randint(k3, (B2,), 0, L2 - 30, dtype=jnp.int32)
    ep2 = sp2 + jax.random.randint(k4, (B2,), 0, 30, dtype=jnp.int32)

    prec2, recall2, f12 = f1_score(sl2, el2, sp2, ep2, tile_rows=8)
    jax.block_until_ready((prec2, recall2, f12))
    _check((float(prec2), float(recall2), float(f12)),
           _reference(sl2, el2, sp2, ep2))

    # Case 3: bf16 logits — native-dtype argmax on v6e/v7x (f32 cast on v5e),
    # tiny-batch pad to the 16-row bf16 sublane packing.
    B3, L3 = 12, 128
    k1, k2, k3, k4, key = jax.random.split(key, 5)
    sl3 = jax.random.normal(k1, (B3, L3), dtype=jnp.bfloat16)
    el3 = jax.random.normal(k2, (B3, L3), dtype=jnp.bfloat16)
    sp3 = jax.random.randint(k3, (B3,), 0, L3 - 16, dtype=jnp.int32)
    ep3 = sp3 + jax.random.randint(k4, (B3,), 0, 16, dtype=jnp.int32)

    prec3, recall3, f13 = f1_score(sl3, el3, sp3, ep3)
    jax.block_until_ready((prec3, recall3, f13))
    _check((float(prec3), float(recall3), float(f13)),
           _reference(sl3, el3, sp3, ep3))

    print("KERNEL_OK")
</pallas_src>

<mosaic_0001>
module attributes {stable_mosaic.version = 11 : i64} {
  func.func @_f1_kernel(%arg0: i32, %arg1: memref<8x128xf32, #tpu.memory_space<vmem>>, %arg2: memref<8x128xf32, #tpu.memory_space<vmem>>, %arg3: memref<8x2xi32, #tpu.memory_space<vmem>>, %arg4: memref<1x128xf32, #tpu.memory_space<vmem>>, %arg5: memref<1x1xf32, #tpu.memory_space<vmem>>, %arg6: memref<1x1xf32, #tpu.memory_space<vmem>>, %arg7: memref<1x1xf32, #tpu.memory_space<vmem>>) attributes {dimension_semantics = [#tpu.dimension_semantics<arbitrary>], iteration_bounds = array<i64: 1>, scalar_prefetch = 0 : i64, scratch_operands = 3 : i64, tpu.core_type = #tpu.core_type<tc>, window_params = [{transform_indices = @transform_0, window_bounds = array<i64: 8, 128>}, {transform_indices = @transform_1, window_bounds = array<i64: 8, 128>}, {transform_indices = @transform_2, window_bounds = array<i64: 8, 2>}, {pipeline_mode = #tpu.pipeline_mode<synchronous>, transform_indices = @transform_3, window_bounds = array<i64: 1, 128>}]} {
    %c0_i32 = arith.constant 0 : i32
    %0 = arith.cmpi eq, %arg0, %c0_i32 : i32
    %1 = arith.extui %0 : i1 to i32
    %c0_i32_0 = arith.constant 0 : i32
    %2 = arith.cmpi ne, %1, %c0_i32_0 : i32
    scf.if %2 {
      %cst_38 = arith.constant 0.000000e+00 : f32
      %80 = vector.broadcast %cst_38 : f32 to vector<1x1xf32>
      %c0_39 = arith.constant 0 : index
      %c0_40 = arith.constant 0 : index
      %81 = vector.load %arg5[%c0_39, %c0_40] : memref<1x1xf32, #tpu.memory_space<vmem>>, vector<1x1xf32>
      tpu.vector_store %arg5[%c0_39, %c0_40], %80 {strides = array<i32>} : memref<1x1xf32, #tpu.memory_space<vmem>>, vector<1x1xf32>,
      %cst_41 = arith.constant 0.000000e+00 : f32
      %82 = vector.broadcast %cst_41 : f32 to vector<1x1xf32>
      %c0_42 = arith.constant 0 : index
      %c0_43 = arith.constant 0 : index
      %83 = vector.load %arg6[%c0_42, %c0_43] : memref<1x1xf32, #tpu.memory_space<vmem>>, vector<1x1xf32>
      tpu.vector_store %arg6[%c0_42, %c0_43], %82 {strides = array<i32>} : memref<1x1xf32, #tpu.memory_space<vmem>>, vector<1x1xf32>,
      %cst_44 = arith.constant 0.000000e+00 : f32
      %84 = vector.broadcast %cst_44 : f32 to vector<1x1xf32>
      %c0_45 = arith.constant 0 : index
      %c0_46 = arith.constant 0 : index
      %85 = vector.load %arg7[%c0_45, %c0_46] : memref<1x1xf32, #tpu.memory_space<vmem>>, vector<1x1xf32>
      tpu.vector_store %arg7[%c0_45, %c0_46], %84 {strides = array<i32>} : memref<1x1xf32, #tpu.memory_space<vmem>>, vector<1x1xf32>,
    } else {
    }
    %3 = tpu.iota {dimensions = array<i32: 1>} : vector<8x128xi32>
    %c0 = arith.constant 0 : index
    %c0_1 = arith.constant 0 : index
    %4 = vector.load %arg1[%c0, %c0_1] : memref<8x128xf32, #tpu.memory_space<vmem>>, vector<8x128xf32>
    %c0_2 = arith.constant 0 : index
    %c0_3 = arith.constant 0 : index
    %5 = vector.load %arg2[%c0_2, %c0_3] : memref<8x128xf32, #tpu.memory_space<vmem>>, vector<8x128xf32>
    %cst = arith.constant dense<0xFF800000> : vector<8xf32>
    %6 = vector.multi_reduction <maximumf>, %4, %cst [1] : vector<8x128xf32> to vector<8xf32>
    %7 = vector.shape_cast %6 : vector<8xf32> to vector<8x1xf32>
    %8 = vector.broadcast %7 : vector<8x1xf32> to vector<8x128xf32>
    %9 = arith.cmpf oeq, %4, %8 : vector<8x128xf32>
    %c128_i32 = arith.constant 128 : i32
    %10 = vector.broadcast %c128_i32 : i32 to vector<8x128xi32>
    %11 = arith.select %9, %3, %10 : vector<8x128xi1>, vector<8x128xi32>
    %cst_4 = arith.constant dense<2147483647> : vector<8xi32>
    %12 = vector.multi_reduction <minsi>, %11, %cst_4 [1] : vector<8x128xi32> to vector<8xi32>
    %13 = vector.shape_cast %12 : vector<8xi32> to vector<8x1xi32>
    %cst_5 = arith.constant dense<0xFF800000> : vector<8xf32>
    %14 = vector.multi_reduction <maximumf>, %5, %cst_5 [1] : vector<8x128xf32> to vector<8xf32>
    %15 = vector.shape_cast %14 : vector<8xf32> to vector<8x1xf32>
    %16 = vector.broadcast %15 : vector<8x1xf32> to vector<8x128xf32>
    %17 = arith.cmpf oeq, %5, %16 : vector<8x128xf32>
    %c128_i32_6 = arith.constant 128 : i32
    %18 = vector.broadcast %c128_i32_6 : i32 to vector<8x128xi32>
    %19 = arith.select %17, %3, %18 : vector<8x128xi1>, vector<8x128xi32>
    %cst_7 = arith.constant dense<2147483647> : vector<8xi32>
    %20 = vector.multi_reduction <minsi>, %19, %cst_7 [1] : vector<8x128xi32> to vector<8xi32>
    %21 = vector.shape_cast %20 : vector<8xi32> to vector<8x1xi32>
    %c0_8 = arith.constant 0 : index
    %c0_9 = arith.constant 0 : index
    %22 = vector.load %arg3[%c0_8, %c0_9] : memref<8x2xi32, #tpu.memory_space<vmem>>, vector<8x2xi32>
    %23 = tpu.iota {dimensions = array<i32: 1>} : vector<8x2xi32>
    %c0_i32_10 = arith.constant 0 : i32
    %24 = vector.broadcast %c0_i32_10 : i32 to vector<8x2xi32>
    %25 = arith.cmpi eq, %23, %24 : vector<8x2xi32>
    %c0_i32_11 = arith.constant 0 : i32
    %26 = vector.broadcast %c0_i32_11 : i32 to vector<8x2xi32>
    %27 = arith.select %25, %22, %26 : vector<8x2xi1>, vector<8x2xi32>
    %cst_12 = arith.constant dense<0> : vector<8xi32>
    %28 = vector.multi_reduction <add>, %27, %cst_12 [1] : vector<8x2xi32> to vector<8xi32>
    %29 = vector.shape_cast %28 : vector<8xi32> to vector<8x1xi32>
    %c1_i32 = arith.constant 1 : i32
    %30 = vector.broadcast %c1_i32 : i32 to vector<8x2xi32>
    %31 = arith.cmpi eq, %23, %30 : vector<8x2xi32>
    %c0_i32_13 = arith.constant 0 : i32
    %32 = vector.broadcast %c0_i32_13 : i32 to vector<8x2xi32>
    %33 = arith.select %31, %22, %32 : vector<8x2xi1>, vector<8x2xi32>
    %cst_14 = arith.constant dense<0> : vector<8xi32>
    %34 = vector.multi_reduction <add>, %33, %cst_14 [1] : vector<8x2xi32> to vector<8xi32>
    %35 = vector.shape_cast %34 : vector<8xi32> to vector<8x1xi32>
    %c8_i32 = arith.constant 8 : i32
    %36 = arith.muli %arg0, %c8_i32 : i32
    %37 = tpu.iota {dimensions = array<i32: 0>} : vector<8x1xi32>
    %38 = vector.broadcast %36 : i32 to vector<8x1xi32>
    %39 = arith.addi %38, %37 : vector<8x1xi32>
    %c8_i32_15 = arith.constant 8 : i32
    %40 = vector.broadcast %c8_i32_15 : i32 to vector<8x1xi32>
    %41 = arith.cmpi slt, %39, %40 : vector<8x1xi32>
    %42 = arith.cmpi slt, %13, %21 : vector<8x1xi32>
    %43 = arith.andi %41, %42 : vector<8x1xi1>
    %44 = arith.subi %21, %13 : vector<8x1xi32>
    %c0_i32_16 = arith.constant 0 : i32
    %45 = vector.broadcast %c0_i32_16 : i32 to vector<8x1xi32>
    %46 = arith.select %43, %44, %45 : vector<8x1xi1>, vector<8x1xi32>
    %47 = arith.subi %35, %29 : vector<8x1xi32>
    %c0_i32_17 = arith.constant 0 : i32
    %48 = vector.broadcast %c0_i32_17 : i32 to vector<8x1xi32>
    %49 = arith.select %41, %47, %48 : vector<8x1xi1>, vector<8x1xi32>
    %50 = arith.minsi %21, %35 : vector<8x1xi32>
    %51 = arith.maxsi %13, %29 : vector<8x1xi32>
    %52 = arith.subi %50, %51 : vector<8x1xi32>
    %c1_i32_18 = arith.constant 1 : i32
    %53 = vector.broadcast %c1_i32_18 : i32 to vector<8x1xi32>
    %54 = arith.addi %52, %53 : vector<8x1xi32>
    %c0_i32_19 = arith.constant 0 : i32
    %55 = vector.broadcast %c0_i32_19 : i32 to vector<8x1xi32>
    %56 = arith.maxsi %54, %55 : vector<8x1xi32>
    %c0_i32_20 = arith.constant 0 : i32
    %57 = vector.broadcast %c0_i32_20 : i32 to vector<8x1xi32>
    %58 = arith.select %41, %56, %57 : vector<8x1xi1>, vector<8x1xi32>
    %c0_21 = arith.constant 0 : index
    %c0_22 = arith.constant 0 : index
    %59 = vector.load %arg5[%c0_21, %c0_22] : memref<1x1xf32, #tpu.memory_space<vmem>>, vector<1x1xf32>
    %60 = arith.sitofp %46 : vector<8x1xi32> to vector<8x1xf32>
    %cst_23 = arith.constant dense<0.000000e+00> : vector<1xf32>
    %61 = vector.multi_reduction <add>, %60, %cst_23 [0] : vector<8x1xf32> to vector<1xf32>
    %62 = vector.shape_cast %61 : vector<1xf32> to vector<1x1xf32>
    %63 = arith.addf %59, %62 : vector<1x1xf32>
    %c0_24 = arith.constant 0 : index
    %c0_25 = arith.constant 0 : index
    %64 = vector.load %arg5[%c0_24, %c0_25] : memref<1x1xf32, #tpu.memory_space<vmem>>, vector<1x1xf32>
    tpu.vector_store %arg5[%c0_24, %c0_25], %63 {strides = array<i32>} : memref<1x1xf32, #tpu.memory_space<vmem>>, vector<1x1xf32>,
    %c0_26 = arith.constant 0 : index
    %c0_27 = arith.constant 0 : index
    %65 = vector.load %arg6[%c0_26, %c0_27] : memref<1x1xf32, #tpu.memory_space<vmem>>, vector<1x1xf32>
    %66 = arith.sitofp %49 : vector<8x1xi32> to vector<8x1xf32>
    %cst_28 = arith.constant dense<0.000000e+00> : vector<1xf32>
    %67 = vector.multi_reduction <add>, %66, %cst_28 [0] : vector<8x1xf32> to vector<1xf32>
    %68 = vector.shape_cast %67 : vector<1xf32> to vector<1x1xf32>
    %69 = arith.addf %65, %68 : vector<1x1xf32>
    %c0_29 = arith.constant 0 : index
    %c0_30 = arith.constant 0 : index
    %70 = vector.load %arg6[%c0_29, %c0_30] : memref<1x1xf32, #tpu.memory_space<vmem>>, vector<1x1xf32>
    tpu.vector_store %arg6[%c0_29, %c0_30], %69 {strides = array<i32>} : memref<1x1xf32, #tpu.memory_space<vmem>>, vector<1x1xf32>,
    %c0_31 = arith.constant 0 : index
    %c0_32 = arith.constant 0 : index
    %71 = vector.load %arg7[%c0_31, %c0_32] : memref<1x1xf32, #tpu.memory_space<vmem>>, vector<1x1xf32>
    %72 = arith.sitofp %58 : vector<8x1xi32> to vector<8x1xf32>
    %cst_33 = arith.constant dense<0.000000e+00> : vector<1xf32>
    %73 = vector.multi_reduction <add>, %72, %cst_33 [0] : vector<8x1xf32> to vector<1xf32>
    %74 = vector.shape_cast %73 : vector<1xf32> to vector<1x1xf32>
    %75 = arith.addf %71, %74 : vector<1x1xf32>
    %c0_34 = arith.constant 0 : index
    %c0_35 = arith.constant 0 : index
    %76 = vector.load %arg7[%c0_34, %c0_35] : memref<1x1xf32, #tpu.memory_space<vmem>>, vector<1x1xf32>
    tpu.vector_store %arg7[%c0_34, %c0_35], %75 {strides = array<i32>} : memref<1x1xf32, #tpu.memory_space<vmem>>, vector<1x1xf32>,
    %c0_i32_36 = arith.constant 0 : i32
    %77 = arith.cmpi eq, %arg0, %c0_i32_36 : i32
    %78 = arith.extui %77 : i1 to i32
    %c0_i32_37 = arith.constant 0 : i32
    %79 = arith.cmpi ne, %78, %c0_i32_37 : i32
    scf.if %79 {
      %c0_38 = arith.constant 0 : index
      %c0_39 = arith.constant 0 : index
      %80 = vector.load %arg5[%c0_38, %c0_39] : memref<1x1xf32, #tpu.memory_space<vmem>>, vector<1x1xf32>
      %cst_40 = arith.constant 1.000000e-10 : f32
      %81 = vector.broadcast %cst_40 : f32 to vector<1x1xf32>
      %82 = arith.addf %80, %81 : vector<1x1xf32>
      %c0_41 = arith.constant 0 : index
      %c0_42 = arith.constant 0 : index
      %83 = vector.load %arg6[%c0_41, %c0_42] : memref<1x1xf32, #tpu.memory_space<vmem>>, vector<1x1xf32>
      %cst_43 = arith.constant 1.000000e-10 : f32
      %84 = vector.broadcast %cst_43 : f32 to vector<1x1xf32>
      %85 = arith.addf %83, %84 : vector<1x1xf32>
      %c0_44 = arith.constant 0 : index
      %c0_45 = arith.constant 0 : index
      %86 = vector.load %arg7[%c0_44, %c0_45] : memref<1x1xf32, #tpu.memory_space<vmem>>, vector<1x1xf32>
      %87 = arith.divf %86, %82 : vector<1x1xf32>
      %cst_46 = arith.constant 1.000000e-10 : f32
      %88 = vector.broadcast %cst_46 : f32 to vector<1x1xf32>
      %89 = arith.addf %87, %88 : vector<1x1xf32>
      %90 = arith.divf %86, %85 : vector<1x1xf32>
      %cst_47 = arith.constant 1.000000e-10 : f32
      %91 = vector.broadcast %cst_47 : f32 to vector<1x1xf32>
      %92 = arith.addf %90, %91 : vector<1x1xf32>
      %cst_48 = arith.constant 2.000000e+00 : f32
      %93 = vector.broadcast %cst_48 : f32 to vector<1x1xf32>
      %94 = arith.mulf %93, %89 : vector<1x1xf32>
      %95 = arith.mulf %94, %92 : vector<1x1xf32>
      %96 = arith.addf %89, %92 : vector<1x1xf32>
      %97 = arith.divf %95, %96 : vector<1x1xf32>
      %cst_49 = arith.constant 1.000000e+00 : f32
      %98 = vector.broadcast %cst_49 : f32 to vector<1x128xf32>
      %99 = tpu.iota {dimensions = array<i32: 1>} : vector<1x128xi32>
      %c0_i32_50 = arith.constant 0 : i32
      %100 = vector.broadcast %c0_i32_50 : i32 to vector<1x128xi32>
      %101 = arith.cmpi eq, %99, %100 : vector<1x128xi32>
      %102 = vector.broadcast %89 : vector<1x1xf32> to vector<1x128xf32>
      %103 = arith.mulf %102, %98 : vector<1x128xf32>
      %c1_i32_51 = arith.constant 1 : i32
      %104 = vector.broadcast %c1_i32_51 : i32 to vector<1x128xi32>
      %105 = arith.cmpi eq, %99, %104 : vector<1x128xi32>
      %106 = vector.broadcast %92 : vector<1x1xf32> to vector<1x128xf32>
      %107 = arith.mulf %106, %98 : vector<1x128xf32>
      %108 = vector.broadcast %97 : vector<1x1xf32> to vector<1x128xf32>
      %109 = arith.mulf %108, %98 : vector<1x128xf32>
      %110 = arith.select %105, %107, %109 : vector<1x128xi1>, vector<1x128xf32>
      %111 = arith.select %101, %103, %110 : vector<1x128xi1>, vector<1x128xf32>
      %c0_52 = arith.constant 0 : index
      %c0_53 = arith.constant 0 : index
      %112 = vector.load %arg4[%c0_52, %c0_53] : memref<1x128xf32, #tpu.memory_space<vmem>>, vector<1x128xf32>
      tpu.vector_store %arg4[%c0_52, %c0_53], %111 {strides = array<i32>} : memref<1x128xf32, #tpu.memory_space<vmem>>, vector<1x128xf32>,
    } else {
    }
    return
  }
  func.func @transform_0(%arg0: i32) -> (i32, i32) {
    %c0_i32 = arith.constant 0 : i32
    %c0_i32_0 = arith.constant 0 : i32
    return %arg0, %c0_i32 : i32, i32
  }
  func.func @transform_1(%arg0: i32) -> (i32, i32) {
    %c0_i32 = arith.constant 0 : i32
    %c0_i32_0 = arith.constant 0 : i32
    return %arg0, %c0_i32 : i32, i32
  }
  func.func @transform_2(%arg0: i32) -> (i32, i32) {
    %c0_i32 = arith.constant 0 : i32
    %c0_i32_0 = arith.constant 0 : i32
    return %arg0, %c0_i32 : i32, i32
  }
  func.func @transform_3(%arg0: i32) -> (i32, i32) {
    %c0_i32 = arith.constant 0 : i32
    %c0_i32_0 = arith.constant 0 : i32
    %c0_i32_1 = arith.constant 0 : i32
    return %c0_i32, %c0_i32_0 : i32, i32
  }
}

</mosaic_0001>

<llo_original>
// kernel: tpu_custom_call.1
$region0: #{tpu_custom_call.1}
  #allocation0 [shape = 'u32[]', space=smem, size = 0x4, offset = 0x4, fixed_abs, tag = 'smem constant byte address 0x4 - core index']
  #allocation1 [shape = 'u32[144,128]{1,0:T(1,128)}', space=vmem, size = 0x12000, scoped, tag = 'internal scratch']
  #allocation2 [shape = 'f32[1,1]{1,0:T(1,128)}', space=vmem, size = 0x200, scoped, tag = 'scratch operand']
  #allocation3 [shape = 'f32[1,1]{1,0:T(1,128)}', space=vmem, size = 0x200, scoped, tag = 'scratch operand']
  #allocation4 [shape = 'f32[1,1]{1,0:T(1,128)}', space=vmem, size = 0x200, scoped, tag = 'scratch operand']
  %s0 = inlined_call_operand.vmem [shape: f32[8,128], index: 0, kind: input, shape index: {}]
  %s1 = inlined_call_operand.hbm [shape: f32[8,128], index: 1, kind: input, shape index: {}]
  %s2 = inlined_call_operand.vmem [shape: s32[8,2], index: 2, kind: input, shape index: {}]
  %s3 = inlined_call_operand.hbm [shape: f32[1,128], index: 3, kind: output, shape index: {}]
  %s4 = sld [smem:[#allocation0]]
  $region34: #{tpu_custom_call.1} parent=0
    _
  %s6 = ssub.s32 1, %s4
  %s7 = scalar_select 0, %s6, %s4
  $region1: #{tpu_custom_call.1} parent=0
    #allocation5 [shape = 'u8[4096]{0}', space=vmem, size = 0x1000, scoped, tag = 'input window, operand 1, single buffered']
    #allocation6 [shape = 's32[1]{0}', space=sflag, size = 0x4, scoped, tag = 'scoped memory for tpu_custom_call.1']
    #allocation7 [shape = 's32[1]{0}', space=sflag, size = 0x4, scoped, tag = 'scoped memory for tpu_custom_call.1']
    #allocation8 [shape = 'u8[512]{0}', space=vmem, size = 0x400, scoped, tag = 'output window, operand 0, single buffered']
    %8 = vsyncpa [#allocation6], 0
    %9 = vsyncpa [#allocation7], 0
    // Predicated region
    $region2: #{tpu_custom_call.1} parent=1 // pred_check
      _
    $region3: #{tpu_custom_call.1} parent=1 // pred_check_branch
      %11 = sbr.rel (0) target = $region5
    $region4: #{tpu_custom_call.1} parent=1 // pred_region
      _
    $region5: #{tpu_custom_call.1} parent=1 // pred_fallthru
      _
    // Predicated region
    $region6: #{tpu_custom_call.1} parent=1 // pred_check
      _
    $region7: #{tpu_custom_call.1} parent=1 // pred_check_branch
      %13 = sbr.rel (0) target = $region9
    $region8: #{tpu_custom_call.1} parent=1 // pred_region
      %s15 = ssub.s32 128, 128
      %16 = vsyncadd [#allocation6], %s15
      %s18 = sshll.u32 [#allocation5], 4
      %s19 = int_to_ptr.vmem [resolvable:$true] %s18
      %21 = dma.hbm_to_vmem [thread:$0]  %s1, 128, %s19, [#allocation6]
    $region9: #{tpu_custom_call.1} parent=1 // pred_fallthru
      _
    // Predicated region
    $region10: #{tpu_custom_call.1} parent=1 // pred_check
      _
    $region11: #{tpu_custom_call.1} parent=1 // pred_check_branch
      %23 = sbr.rel (0) target = $region13
    $region12: #{tpu_custom_call.1} parent=1 // pred_region
      _
    $region13: #{tpu_custom_call.1} parent=1 // pred_fallthru
      _
    // Predicated region
    $region14: #{tpu_custom_call.1} parent=1 // pred_check
      _
    $region15: #{tpu_custom_call.1} parent=1 // pred_check_branch
      %25 = sbr.rel (0) target = $region17
    $region16: #{tpu_custom_call.1} parent=1 // pred_region
      %26 = dma.done [#allocation6], 128
    $region17: #{tpu_custom_call.1} parent=1 // pred_fallthru
      _
    %p27 = scmp.eq.s32.totalorder 0, 0
    // Predicated region
    $region18: #{tpu_custom_call.1} parent=1 // pred_check
      %p28 = pneg %p27
    $region19: #{tpu_custom_call.1} parent=1 // pred_check_branch
      %30 = sbr.rel (%p28) target = $region21
    $region20: #{tpu_custom_call.1} parent=1 // pred_region
      %vm31 = vcmask 0
      %32 = vst.msk [vmem:[#allocation2] sm:$0x1] %vm31, 0.0
      %33 = vst.msk [vmem:[#allocation3] sm:$0x1] %vm31, 0.0
      %34 = vst.msk [vmem:[#allocation4] sm:$0x1] %vm31, 0.0
    $region21: #{tpu_custom_call.1} parent=1 // pred_fallthru
      _
    %v35 = vlaneseq
    %v36 = vand.u32 %v35, 127
    %v37 = vld [vmem:[%s0] sm:$0xff]
    %v38 = vld [vmem:[#allocation5] sm:$0xff]
    %39 = vmax.xlane.f32.xlu0 %v37
    %v40 = vpop.xlane.xlu0 %39
    %vm41 = vcmp.eq.f32.partialorder %v37, %v40
    %v42 = vsel %vm41, %v36, 128
    %v43 = vand.u32 %v42, 65535
    %v44 = vshra.s32 %v42, 16
    %v45 = vcvt.s32.f32 %v43
    %v46 = vcvt.s32.f32 %v44
    %47 = vmin.xlane.f32.xlu0 %v46
    %v48 = vpop.xlane.xlu0 %47
    %vm49 = vcmp.eq.f32.partialorder %v46, %v48
    %v50 = vsel %vm49, %v45, inf
    %51 = vmin.xlane.f32.xlu0 %v50
    %v52 = vpop.xlane.xlu0 %51
    %v53 = vcvt.f32.s32 %v52
    %v54 = vcvt.f32.s32 %v48
    %v55 = vshll.u32 %v54, 16
    %v56 = vadd.s32 %v55, %v53
    %57 = vmax.xlane.f32.xlu0 %v38
    %v58 = vpop.xlane.xlu0 %57
    %vm59 = vcmp.eq.f32.partialorder %v38, %v58
    %v60 = vsel %vm59, %v36, 128
    %v61 = vand.u32 %v60, 65535
    %v62 = vshra.s32 %v60, 16
    %v63 = vcvt.s32.f32 %v61
    %v64 = vcvt.s32.f32 %v62
    %65 = vmin.xlane.f32.xlu0 %v64
    %v66 = vpop.xlane.xlu0 %65
    %vm67 = vcmp.eq.f32.partialorder %v64, %v66
    %v68 = vsel %vm67, %v63, inf
    %69 = vmin.xlane.f32.xlu0 %v68
    %v70 = vpop.xlane.xlu0 %69
    %v71 = vcvt.f32.s32 %v70
    %v72 = vcvt.f32.s32 %v66
    %v73 = vshll.u32 %v72, 16
    %v74 = vadd.s32 %v73, %v71
    %v75 = vld [vmem:[%s2] sm:$0xff]
    %vm76 = vcmp.eq.s32.totalorder %v36, 0
    %v77 = vsel %vm76, %v75, 0
    %vm78 = vcmask 15360
    %v79 = vsel %vm78, %v77, 0
    %v80 = vand.u32 %v79, 65535
    %v81 = vshrl.u32 %v79, 16
    %v82 = vcvt.s32.f32 %v80
    %v83 = vcvt.s32.f32 %v81
    %84 = vadd.xlane.f32.xlu0 %v82
    %v85 = vpop.xlane.xlu0 %84
    %86 = vadd.xlane.f32.xlu0 %v83
    %v87 = vpop.xlane.xlu0 %86
    %v88 = vcvt.f32.s32 %v85
    %v89 = vcvt.f32.s32 %v87
    %v90 = vshll.u32 %v89, 16
    %v91 = vadd.s32 %v90, %v88
    %vm92 = vcmp.eq.s32.totalorder %v36, 1
    %v93 = vsel %vm92, %v75, 0
    %v94 = vsel %vm78, %v93, 0
    %v95 = vand.u32 %v94, 65535
    %v96 = vshrl.u32 %v94, 16
    %v97 = vcvt.s32.f32 %v95
    %v98 = vcvt.s32.f32 %v96
    %99 = vadd.xlane.f32.xlu0 %v97
    %v100 = vpop.xlane.xlu0 %99
    %101 = vadd.xlane.f32.xlu0 %v98
    %v102 = vpop.xlane.xlu0 %101
    %v103 = vcvt.f32.s32 %v100
    %v104 = vcvt.f32.s32 %v102
    %v105 = vshll.u32 %v104, 16
    %v106 = vadd.s32 %v105, %v103
    %s107 = smul.u32 0, 8
    %v108 = vlaneseq
    %v109 = vshrl.u32 %v108, 7
    %v110 = vstv %s107
    %v111 = vadd.s32 %v110, %v109
    %vm112 = vcmp.lt.s32.totalorder %v111, 8
    %vm113 = vcmp.lt.s32.totalorder %v56, %v74
    %vm114 = vmand %vm112, %vm113
    %v115 = vsub.s32 %v74, %v56
    %v116 = vsel %vm114, %v115, 0
    %v117 = vsub.s32 %v106, %v91
    %v118 = vsel %vm112, %v117, 0
    %vm119 = vcmp.lt.s32.totalorder %v74, %v106
    %v120 = vsel %vm119, %v74, %v106
    %vm121 = vcmp.gt.s32.totalorder %v56, %v91
    %v122 = vsel %vm121, %v56, %v91
    %v123 = vsub.s32 %v120, %v122
    %v124 = vadd.s32 %v123, 1
    %vm125 = vcmp.gt.s32.totalorder %v124, 0
    %v126 = vsel %vm125, %v124, 0
    %v127 = vsel %vm112, %v126, 0
    %v128 = vld [vmem:[#allocation2] sm:$0x1]
    %v129 = vcvt.s32.f32 %v116
    %v130 = vrot.slane %v129, 4
    %v131 = vadd.f32 %v129, %v130
    %v132 = vrot.slane %v131, 2
    %v133 = vadd.f32 %v131, %v132
    %v134 = vrot.slane %v133, 1
    %v135 = vadd.f32 %v133, %v134
    %v136 = vadd.f32 %v128, %v135
    %vm137 = vcmask 0
    %138 = vst.msk [vmem:[#allocation2] sm:$0x1] %vm137, %v136
    %v139 = vld [vmem:[#allocation3] sm:$0x1]
    %v140 = vcvt.s32.f32 %v118
    %v141 = vrot.slane %v140, 4
    %v142 = vadd.f32 %v140, %v141
    %v143 = vrot.slane %v142, 2
    %v144 = vadd.f32 %v142, %v143
    %v145 = vrot.slane %v144, 1
    %v146 = vadd.f32 %v144, %v145
    %v147 = vadd.f32 %v139, %v146
    %148 = vst.msk [vmem:[#allocation3] sm:$0x1] %vm137, %v147
    %v149 = vld [vmem:[#allocation4] sm:$0x1]
    %v150 = vcvt.s32.f32 %v127
    %v151 = vrot.slane %v150, 4
    %v152 = vadd.f32 %v150, %v151
    %v153 = vrot.slane %v152, 2
    %v154 = vadd.f32 %v152, %v153
    %v155 = vrot.slane %v154, 1
    %v156 = vadd.f32 %v154, %v155
    %v157 = vadd.f32 %v149, %v156
    %158 = vst.msk [vmem:[#allocation4] sm:$0x1] %vm137, %v157
    // Predicated region
    $region22: #{tpu_custom_call.1} parent=1 // pred_check
      %p159 = pneg %p27
    $region23: #{tpu_custom_call.1} parent=1 // pred_check_branch
      %161 = sbr.rel (%p159) target = $region25
    $region24: #{tpu_custom_call.1} parent=1 // pred_region
      %v162 = vld [vmem:[#allocation2] sm:$0x1]
      %v163 = vadd.f32 %v162, 1e-10
      %v164 = vld [vmem:[#allocation3] sm:$0x1]
      %v165 = vadd.f32 %v164, 1e-10
      %v166 = vld [vmem:[#allocation4] sm:$0x1]
      %v167 = vrcp.pop %v163
      %v168 = vmul.f32 %v166, %v167
      %v169 = vadd.f32 %v168, 1e-10
      %v170 = vrcp.pop %v165
      %v171 = vmul.f32 %v166, %v170
      %v172 = vadd.f32 %v171, 1e-10
      %v173 = vmul.f32 %v169, 2.0
      %v174 = vmul.f32 %v173, %v172
      %v175 = vadd.f32 %v169, %v172
      %v176 = vrcp.pop %v175
      %v177 = vmul.f32 %v174, %v176
      %179 = vset.pattern.permute.xlu0 0
      %180 = vperm.xlu0 %179, %v169
      %v181 = vpop.permute.xlu0 %180
      %v183 = vlaneseq
      %v184 = vshrl.u32 %v183, 7
      %v185 = vsub.s32 0, %v184
      %v186 = vrot.slane %v181, %v185
      %188 = vset.pattern.permute.xlu0 0
      %189 = vperm.xlu0 %188, %v172
      %v190 = vpop.permute.xlu0 %189
      %v192 = vlaneseq
      %v193 = vshrl.u32 %v192, 7
      %v194 = vsub.s32 0, %v193
      %v195 = vrot.slane %v190, %v194
      %197 = vset.pattern.permute.xlu0 0
      %198 = vperm.xlu0 %197, %v177
      %v199 = vpop.permute.xlu0 %198
      %v201 = vlaneseq
      %v202 = vshrl.u32 %v201, 7
      %v203 = vsub.s32 0, %v202
      %v204 = vrot.slane %v199, %v203
      %v205 = vsel %vm92, %v195, %v204
      %v206 = vsel %vm76, %v186, %v205
      %207 = vst [vmem:[#allocation8] sm:$0x1] %v206
    $region25: #{tpu_custom_call.1} parent=1 // pred_fallthru
      _
    // Predicated region
    $region26: #{tpu_custom_call.1} parent=1 // pred_check
      _
    $region27: #{tpu_custom_call.1} parent=1 // pred_check_branch
      %209 = sbr.rel (0) target = $region29
    $region28: #{tpu_custom_call.1} parent=1 // pred_region
      %s211 = ssub.s32 16, 16
      %212 = vsyncadd [#allocation7], %s211
      %s214 = sshll.u32 [#allocation8], 4
      %s215 = int_to_ptr.vmem [resolvable:$true] %s214
      %217 = dma.vmem_to_hbm [thread:$0]  %s215, 16, %s3, [#allocation7]
    $region29: #{tpu_custom_call.1} parent=1 // pred_fallthru
      _
    // Predicated region
    $region30: #{tpu_custom_call.1} parent=1 // pred_check
      _
    $region31: #{tpu_custom_call.1} parent=1 // pred_check_branch
      %219 = sbr.rel (0) target = $region33
    $region32: #{tpu_custom_call.1} parent=1 // pred_region
      %220 = dma.done [#allocation7], 16
    $region33: #{tpu_custom_call.1} parent=1 // pred_fallthru
      _
    %221 = vsyncpa [#allocation6], 1
    %222 = vsyncpa [#allocation7], 1

</llo_original>
